<compile_context>
chip_gen: v7x
topology: tpu7x:2x2x1
jax: 0.10.0
libtpu: 0.0.40
codegen_flags: <defaults>
</compile_context>

<pallas_src>
import jax
import jax.numpy as jnp
from jax.experimental import pallas as pl
from jax.experimental.pallas import tpu as pltpu


def _matmul_leaky_kernel(w_ref, p_ref, o_ref):
    # w_ref: (Coutp, KKCp)  flipped ConvTranspose2d weight as a matrix (zero padded)
    # p_ref: (KKCp, Lp)     im2col patch slab; lanes = (n, ho, wo) flattened, zero padded
    # o_ref: (Coutp, Lp)    lane-dense output slab (Lp multiple of 128, Coutp multiple of 8)
    acc = jnp.dot(w_ref[...], p_ref[...], preferred_element_type=jnp.float32)
    # fused elementwise: torch.where(y > 0, y, y * 5.77)
    o_ref[...] = jnp.where(acc > 0, acc, acc * 5.77).astype(o_ref.dtype)


def model_forward(x_nchw, w_t, *, stride=2):
    """x_nchw: (N, Cin, Hin, Win); w_t: (Cin, Cout, K, K) ConvTranspose2d weight."""
    N, Cin, Hin, Win = x_nchw.shape
    _, Cout, K, _ = w_t.shape
    s = stride
    Ho = (Hin - 1) * s + K
    Wo = (Win - 1) * s + K
    HW = Ho * Wo
    L = N * HW                               # whole batch folded into the lane axis

    KKC = K * K * Cin
    KKCp = ((KKC + 7) // 8) * 8              # sublane-pad the contraction dim (250 -> 256)
    Coutp = ((Cout + 7) // 8) * 8            # sublane-pad output rows (11 -> 16)
    Lp = ((L + 127) // 128) * 128            # lane-pad the output minor dim

    # ---- wrapper-side layout plumbing (pure XLA, minimal op count) --------
    # Tiny transpose of the raw input so the batch dim ends up inside the lanes.
    x_t = jnp.transpose(x_nchw, (1, 0, 2, 3))                   # (Cin, N, Hin, Win), ~6 KiB

    # Zero-dilate by the stride AND pad by (K-1) with a single scatter.
    Hd = (Hin - 1) * s + 1
    Wd = (Win - 1) * s + 1
    Hp = Hd + 2 * (K - 1)
    Wp = Wd + 2 * (K - 1)
    x_pad = jnp.zeros((Cin, N, Hp, Wp), x_t.dtype)
    x_pad = x_pad.at[:, :, K - 1:K - 1 + Hd:s, K - 1:K - 1 + Wd:s].set(x_t)

    # im2col: contraction ordering (kh, kw, ci); lane ordering (n, ho, wo).
    # No large transposes — the stack already lands in the matmul layout.
    patches = jnp.stack(
        [x_pad[:, :, kh:kh + Ho, kw:kw + Wo]
         for kh in range(K) for kw in range(K)], axis=0)         # (K*K, Cin, N, Ho, Wo)
    patches = patches.reshape(KKC, L)
    patches = jnp.pad(patches, ((0, KKCp - KKC), (0, Lp - L)))   # (KKCp, Lp)

    # ConvTranspose weight (Cin, Cout, K, K) -> spatial flip -> (Cout, K, K, Cin) matrix,
    # flatten order (kh, kw, ci) matching the patch contraction ordering.
    w_mat = jnp.transpose(w_t[:, :, ::-1, ::-1], (1, 2, 3, 0)).reshape(Cout, KKC)
    w_mat = jnp.pad(w_mat, ((0, Coutp - Cout), (0, KKCp - KKC)))  # (Coutp, KKCp)

    # ---- single-step Pallas call: one MXU matmul for the whole batch ------
    # VMEM footprint: ~0.9 MiB patches + ~16 KiB weight + ~56 KiB output —
    # far inside every generation's VMEM (incl. v7x 64 MiB), so no tiling.
    out = pl.pallas_call(
        _matmul_leaky_kernel,
        out_shape=jax.ShapeDtypeStruct((Coutp, Lp), x_nchw.dtype),
        grid=(1,),
        in_specs=[
            pl.BlockSpec((Coutp, KKCp), lambda i: (0, 0)),
            pl.BlockSpec((KKCp, Lp), lambda i: (0, 0)),
        ],
        out_specs=pl.BlockSpec((Coutp, Lp), lambda i: (0, 0)),
        compiler_params=pltpu.CompilerParams(
            dimension_semantics=("arbitrary",)),
    )(w_mat, patches)

    # Strip padding; lanes are (n, ho, wo), so one reshape + one small (~35 KiB) transpose.
    out = out[:Cout, :L].reshape(Cout, N, Ho, Wo)
    return jnp.transpose(out, (1, 0, 2, 3))                      # (N, Cout, Ho, Wo)


def ref_forward(x, w_t, *, stride=2):
    """Pure-JAX reference (direct scatter formulation of ConvTranspose2d)."""
    N, Cin, Hin, Win = x.shape
    _, Cout, K, _ = w_t.shape
    Ho = (Hin - 1) * stride + K
    Wo = (Win - 1) * stride + K
    y = jnp.zeros((N, Cout, Ho, Wo), x.dtype)
    for kh in range(K):
        for kw in range(K):
            contrib = jnp.einsum('nchw,cd->ndhw', x, w_t[:, :, kh, kw])
            y = y.at[:, :,
                     kh:kh + (Hin - 1) * stride + 1:stride,
                     kw:kw + (Win - 1) * stride + 1:stride].add(contrib)
    return jnp.where(y > 0, y, y * 5.77)


if __name__ == "__main__":
    # Small shapes consistent with the module: Cin=10, Cout=11, K=5, stride=2.
    N, Cin, Cout, K, stride = 2, 10, 11, 5, 2
    Hin, Win = 9, 8

    key = jax.random.PRNGKey(0)
    kx, kw = jax.random.split(key)
    x5 = jax.random.normal(kx, (N, Cin, Hin, Win), dtype=jnp.float32)
    # Deterministic ConvTranspose2d weight, shape (Cin, Cout, K, K), bias=False.
    w_t = (jax.random.normal(kw, (Cin, Cout, K, K), dtype=jnp.float32)
           * (1.0 / (Cin * K * K) ** 0.5))

    fwd = jax.jit(lambda x, w: model_forward(x, w, stride=stride))
    out = jax.block_until_ready(fwd(x5, w_t))
    ref = jax.block_until_ready(ref_forward(x5, w_t, stride=stride))

    assert out.shape == (N, Cout, (Hin - 1) * stride + K, (Win - 1) * stride + K)
    assert jnp.allclose(out, ref, rtol=1e-4, atol=1e-4), \
        f"max abs err {jnp.max(jnp.abs(out - ref))}"
    print("KERNEL_OK")
</pallas_src>

<mosaic_0001>
module attributes {stable_mosaic.version = 11 : i64} {
  func.func @_matmul_leaky_kernel(%arg0: i32, %arg1: memref<16x256xf32, #tpu.memory_space<vmem>>, %arg2: memref<256x896xf32, #tpu.memory_space<vmem>>, %arg3: memref<16x896xf32, #tpu.memory_space<vmem>>) attributes {dimension_semantics = [#tpu.dimension_semantics<arbitrary>], iteration_bounds = array<i64: 1>, scalar_prefetch = 0 : i64, scratch_operands = 0 : i64, tpu.core_type = #tpu.core_type<tc>, window_params = [{pipeline_mode = #tpu.pipeline_mode<synchronous>, transform_indices = @transform_0, window_bounds = array<i64: 16, 256>}, {pipeline_mode = #tpu.pipeline_mode<synchronous>, transform_indices = @transform_1, window_bounds = array<i64: 256, 896>}, {pipeline_mode = #tpu.pipeline_mode<synchronous>, transform_indices = @transform_2, window_bounds = array<i64: 16, 896>}]} {
    %c0 = arith.constant 0 : index
    %c0_0 = arith.constant 0 : index
    %0 = vector.load %arg1[%c0, %c0_0] : memref<16x256xf32, #tpu.memory_space<vmem>>, vector<16x256xf32>
    %c0_1 = arith.constant 0 : index
    %c0_2 = arith.constant 0 : index
    %1 = vector.load %arg2[%c0_1, %c0_2] : memref<256x896xf32, #tpu.memory_space<vmem>>, vector<256x896xf32>
    %cst = arith.constant dense<0.000000e+00> : vector<16x896xf32>
    %2 = tpu.matmul %0, %1, %cst {dimension_numbers = #tpu.dot_dimension_numbers<[1], [0], [0], [1], [0, 0, 1, 1], [], []>} : vector<16x256xf32>, vector<256x896xf32>, vector<16x896xf32> -> vector<16x896xf32>
    %cst_3 = arith.constant 0.000000e+00 : f32
    %3 = vector.broadcast %cst_3 : f32 to vector<16x896xf32>
    %4 = arith.cmpf ogt, %2, %3 : vector<16x896xf32>
    %cst_4 = arith.constant 5.770000e+00 : f32
    %5 = vector.broadcast %cst_4 : f32 to vector<16x896xf32>
    %6 = arith.mulf %2, %5 : vector<16x896xf32>
    %7 = arith.select %4, %2, %6 : vector<16x896xi1>, vector<16x896xf32>
    %c0_5 = arith.constant 0 : index
    %c0_6 = arith.constant 0 : index
    %8 = vector.load %arg3[%c0_5, %c0_6] : memref<16x896xf32, #tpu.memory_space<vmem>>, vector<16x896xf32>
    tpu.vector_store %arg3[%c0_5, %c0_6], %7 {strides = array<i32>} : memref<16x896xf32, #tpu.memory_space<vmem>>, vector<16x896xf32>,
    return
  }
  func.func @transform_0(%arg0: i32) -> (i32, i32) {
    %c0_i32 = arith.constant 0 : i32
    %c0_i32_0 = arith.constant 0 : i32
    %c0_i32_1 = arith.constant 0 : i32
    return %c0_i32, %c0_i32_0 : i32, i32
  }
  func.func @transform_1(%arg0: i32) -> (i32, i32) {
    %c0_i32 = arith.constant 0 : i32
    %c0_i32_0 = arith.constant 0 : i32
    %c0_i32_1 = arith.constant 0 : i32
    return %c0_i32, %c0_i32_0 : i32, i32
  }
  func.func @transform_2(%arg0: i32) -> (i32, i32) {
    %c0_i32 = arith.constant 0 : i32
    %c0_i32_0 = arith.constant 0 : i32
    %c0_i32_1 = arith.constant 0 : i32
    return %c0_i32, %c0_i32_0 : i32, i32
  }
}

</mosaic_0001>

<llo_original>
// kernel: _lambda_.1
$region0: #{_lambda_.1}
  #allocation0 [shape = 'u32[]', space=smem, size = 0x4, offset = 0x4, fixed_abs, tag = 'smem constant byte address 0x4 - core index']
  #allocation1 [shape = 'u32[144,128]{1,0:T(1,128)}', space=vmem, size = 0x12000, scoped, tag = 'internal scratch']
  %s0 = inlined_call_operand.vmem [shape: f32[16,256], index: 0, kind: input, shape index: {}]
  %s1 = inlined_call_operand.vmem [shape: f32[256,896], index: 1, kind: input, shape index: {}]
  %s2 = inlined_call_operand.vmem [shape: f32[16,896], index: 2, kind: output, shape index: {}]
  %s3 = sld [smem:[#allocation0]]
  $region18: #{_lambda_.1} parent=0
    _
  %s5 = ssub.s32 1, %s3
  %s6 = scalar_select 0, %s5, %s3
  // Predicated region
  $region2: #{_lambda_.1} parent=0 // pred_check
    _
  $region3: #{_lambda_.1} parent=0 // pred_check_branch
    %8 = sbr.rel (0) target = $region5
  $region4: #{_lambda_.1} parent=0 // pred_region
    _
  $region5: #{_lambda_.1} parent=0 // pred_fallthru
    _
  // Predicated region
  $region6: #{_lambda_.1} parent=0 // pred_check
    _
  $region7: #{_lambda_.1} parent=0 // pred_check_branch
    %10 = sbr.rel (0) target = $region9
  $region8: #{_lambda_.1} parent=0 // pred_region
    _
  $region9: #{_lambda_.1} parent=0 // pred_fallthru
    _
  %v11 = vld [vmem:[%s0] sm:$0xff]
  %v12 = vld [vmem:[%s0 + $0x8] sm:$0xff]
  %v13 = vld [vmem:[%s0 + $0x10] sm:$0xff]
  %v14 = vld [vmem:[%s0 + $0x18] sm:$0xff]
  %v15 = vld [vmem:[%s1] sm:$0xff]
  %v16 = vld [vmem:[%s1 + $0x8] sm:$0xff]
  %v17 = vld [vmem:[%s1 + $0x10] sm:$0xff]
  %v18 = vld [vmem:[%s1 + $0x18] sm:$0xff]
  %v19 = vld [vmem:[%s1 + $0x20] sm:$0xff]
  %v20 = vld [vmem:[%s1 + $0x28] sm:$0xff]
  %v21 = vld [vmem:[%s1 + $0x30] sm:$0xff]
  %v22 = vld [vmem:[%s1 + $0x38] sm:$0xff]
  %v23 = vld [vmem:[%s1 + $0x40] sm:$0xff]
  %v24 = vld [vmem:[%s1 + $0x48] sm:$0xff]
  %v25 = vld [vmem:[%s1 + $0x50] sm:$0xff]
  %v26 = vld [vmem:[%s1 + $0x58] sm:$0xff]
  %v27 = vld [vmem:[%s1 + $0x60] sm:$0xff]
  %v28 = vld [vmem:[%s1 + $0x68] sm:$0xff]
  %v29 = vld [vmem:[%s1 + $0x70] sm:$0xff]
  %v30 = vld [vmem:[%s1 + $0x78] sm:$0xff]
  %v31 = vld [vmem:[%s1 + $0x80] sm:$0xff]
  %v32 = vld [vmem:[%s1 + $0x88] sm:$0xff]
  %v33 = vld [vmem:[%s1 + $0x90] sm:$0xff]
  %v34 = vld [vmem:[%s1 + $0x98] sm:$0xff]
  %v35 = vld [vmem:[%s1 + $0xa0] sm:$0xff]
  %v36 = vld [vmem:[%s1 + $0xa8] sm:$0xff]
  %v37 = vld [vmem:[%s1 + $0xb0] sm:$0xff]
  %v38 = vld [vmem:[%s1 + $0xb8] sm:$0xff]
  %v39 = vld [vmem:[%s1 + $0xc0] sm:$0xff]
  %v40 = vld [vmem:[%s1 + $0xc8] sm:$0xff]
  %v41 = vld [vmem:[%s1 + $0xd0] sm:$0xff]
  %v42 = vld [vmem:[%s1 + $0xd8] sm:$0xff]
  %v43 = vld [vmem:[%s1 + $0xe0] sm:$0xff]
  %v44 = vld [vmem:[%s1 + $0xe8] sm:$0xff]
  %v45 = vld [vmem:[%s1 + $0xf0] sm:$0xff]
  %v46 = vld [vmem:[%s1 + $0xf8] sm:$0xff]
  %v47 = vld [vmem:[%s1 + $0x100] sm:$0xff]
  %v48 = vld [vmem:[%s1 + $0x108] sm:$0xff]
  %v49 = vld [vmem:[%s1 + $0x110] sm:$0xff]
  %v50 = vld [vmem:[%s1 + $0x118] sm:$0xff]
  %v51 = vld [vmem:[%s1 + $0x120] sm:$0xff]
  %v52 = vld [vmem:[%s1 + $0x128] sm:$0xff]
  %v53 = vld [vmem:[%s1 + $0x130] sm:$0xff]
  %v54 = vld [vmem:[%s1 + $0x138] sm:$0xff]
  %v55 = vld [vmem:[%s1 + $0x140] sm:$0xff]
  %v56 = vld [vmem:[%s1 + $0x148] sm:$0xff]
  %v57 = vld [vmem:[%s1 + $0x150] sm:$0xff]
  %v58 = vld [vmem:[%s1 + $0x158] sm:$0xff]
  %v59 = vld [vmem:[%s1 + $0x160] sm:$0xff]
  %v60 = vld [vmem:[%s1 + $0x168] sm:$0xff]
  %v61 = vld [vmem:[%s1 + $0x170] sm:$0xff]
  %v62 = vld [vmem:[%s1 + $0x178] sm:$0xff]
  %v63 = vld [vmem:[%s1 + $0x180] sm:$0xff]
  %v64 = vld [vmem:[%s1 + $0x188] sm:$0xff]
  %v65 = vld [vmem:[%s1 + $0x190] sm:$0xff]
  %v66 = vld [vmem:[%s1 + $0x198] sm:$0xff]
  %v67 = vld [vmem:[%s1 + $0x1a0] sm:$0xff]
  %v68 = vld [vmem:[%s1 + $0x1a8] sm:$0xff]
  %v69 = vld [vmem:[%s1 + $0x1b0] sm:$0xff]
  %v70 = vld [vmem:[%s1 + $0x1b8] sm:$0xff]
  %v71 = vld [vmem:[%s1 + $0x1c0] sm:$0xff]
  %v72 = vld [vmem:[%s1 + $0x1c8] sm:$0xff]
  %v73 = vld [vmem:[%s1 + $0x1d0] sm:$0xff]
  %v74 = vld [vmem:[%s1 + $0x1d8] sm:$0xff]
  %v75 = vld [vmem:[%s1 + $0x1e0] sm:$0xff]
  %v76 = vld [vmem:[%s1 + $0x1e8] sm:$0xff]
  %v77 = vld [vmem:[%s1 + $0x1f0] sm:$0xff]
  %v78 = vld [vmem:[%s1 + $0x1f8] sm:$0xff]
  %v79 = vld [vmem:[%s1 + $0x200] sm:$0xff]
  %v80 = vld [vmem:[%s1 + $0x208] sm:$0xff]
  %v81 = vld [vmem:[%s1 + $0x210] sm:$0xff]
  %v82 = vld [vmem:[%s1 + $0x218] sm:$0xff]
  %v83 = vld [vmem:[%s1 + $0x220] sm:$0xff]
  %v84 = vld [vmem:[%s1 + $0x228] sm:$0xff]
  %v85 = vld [vmem:[%s1 + $0x230] sm:$0xff]
  %v86 = vld [vmem:[%s1 + $0x238] sm:$0xff]
  %v87 = vld [vmem:[%s1 + $0x240] sm:$0xff]
  %v88 = vld [vmem:[%s1 + $0x248] sm:$0xff]
  %v89 = vld [vmem:[%s1 + $0x250] sm:$0xff]
  %v90 = vld [vmem:[%s1 + $0x258] sm:$0xff]
  %v91 = vld [vmem:[%s1 + $0x260] sm:$0xff]
  %v92 = vld [vmem:[%s1 + $0x268] sm:$0xff]
  %v93 = vld [vmem:[%s1 + $0x270] sm:$0xff]
  %v94 = vld [vmem:[%s1 + $0x278] sm:$0xff]
  %v95 = vld [vmem:[%s1 + $0x280] sm:$0xff]
  %v96 = vld [vmem:[%s1 + $0x288] sm:$0xff]
  %v97 = vld [vmem:[%s1 + $0x290] sm:$0xff]
  %v98 = vld [vmem:[%s1 + $0x298] sm:$0xff]
  %v99 = vld [vmem:[%s1 + $0x2a0] sm:$0xff]
  %v100 = vld [vmem:[%s1 + $0x2a8] sm:$0xff]
  %v101 = vld [vmem:[%s1 + $0x2b0] sm:$0xff]
  %v102 = vld [vmem:[%s1 + $0x2b8] sm:$0xff]
  %v103 = vld [vmem:[%s1 + $0x2c0] sm:$0xff]
  %v104 = vld [vmem:[%s1 + $0x2c8] sm:$0xff]
  %v105 = vld [vmem:[%s1 + $0x2d0] sm:$0xff]
  %v106 = vld [vmem:[%s1 + $0x2d8] sm:$0xff]
  %v107 = vld [vmem:[%s1 + $0x2e0] sm:$0xff]
  %v108 = vld [vmem:[%s1 + $0x2e8] sm:$0xff]
  %v109 = vld [vmem:[%s1 + $0x2f0] sm:$0xff]
  %v110 = vld [vmem:[%s1 + $0x2f8] sm:$0xff]
  %v111 = vld [vmem:[%s1 + $0x300] sm:$0xff]
  %v112 = vld [vmem:[%s1 + $0x308] sm:$0xff]
  %v113 = vld [vmem:[%s1 + $0x310] sm:$0xff]
  %v114 = vld [vmem:[%s1 + $0x318] sm:$0xff]
  %v115 = vld [vmem:[%s1 + $0x320] sm:$0xff]
  %v116 = vld [vmem:[%s1 + $0x328] sm:$0xff]
  %v117 = vld [vmem:[%s1 + $0x330] sm:$0xff]
  %v118 = vld [vmem:[%s1 + $0x338] sm:$0xff]
  %v119 = vld [vmem:[%s1 + $0x340] sm:$0xff]
  %v120 = vld [vmem:[%s1 + $0x348] sm:$0xff]
  %v121 = vld [vmem:[%s1 + $0x350] sm:$0xff]
  %v122 = vld [vmem:[%s1 + $0x358] sm:$0xff]
  %v123 = vld [vmem:[%s1 + $0x360] sm:$0xff]
  %v124 = vld [vmem:[%s1 + $0x368] sm:$0xff]
  %v125 = vld [vmem:[%s1 + $0x370] sm:$0xff]
  %v126 = vld [vmem:[%s1 + $0x378] sm:$0xff]
  %v127 = vld [vmem:[%s1 + $0x380] sm:$0xff]
  %v128 = vld [vmem:[%s1 + $0x388] sm:$0xff]
  %v129 = vld [vmem:[%s1 + $0x390] sm:$0xff]
  %v130 = vld [vmem:[%s1 + $0x398] sm:$0xff]
  %v131 = vld [vmem:[%s1 + $0x3a0] sm:$0xff]
  %v132 = vld [vmem:[%s1 + $0x3a8] sm:$0xff]
  %v133 = vld [vmem:[%s1 + $0x3b0] sm:$0xff]
  %v134 = vld [vmem:[%s1 + $0x3b8] sm:$0xff]
  %v135 = vld [vmem:[%s1 + $0x3c0] sm:$0xff]
  %v136 = vld [vmem:[%s1 + $0x3c8] sm:$0xff]
  %v137 = vld [vmem:[%s1 + $0x3d0] sm:$0xff]
  %v138 = vld [vmem:[%s1 + $0x3d8] sm:$0xff]
  %v139 = vld [vmem:[%s1 + $0x3e0] sm:$0xff]
  %v140 = vld [vmem:[%s1 + $0x3e8] sm:$0xff]
  %v141 = vld [vmem:[%s1 + $0x3f0] sm:$0xff]
  %v142 = vld [vmem:[%s1 + $0x3f8] sm:$0xff]
  %v143 = vld [vmem:[%s1 + $0x400] sm:$0xff]
  %v144 = vld [vmem:[%s1 + $0x408] sm:$0xff]
  %v145 = vld [vmem:[%s1 + $0x410] sm:$0xff]
  %v146 = vld [vmem:[%s1 + $0x418] sm:$0xff]
  %v147 = vld [vmem:[%s1 + $0x420] sm:$0xff]
  %v148 = vld [vmem:[%s1 + $0x428] sm:$0xff]
  %v149 = vld [vmem:[%s1 + $0x430] sm:$0xff]
  %v150 = vld [vmem:[%s1 + $0x438] sm:$0xff]
  %v151 = vld [vmem:[%s1 + $0x440] sm:$0xff]
  %v152 = vld [vmem:[%s1 + $0x448] sm:$0xff]
  %v153 = vld [vmem:[%s1 + $0x450] sm:$0xff]
  %v154 = vld [vmem:[%s1 + $0x458] sm:$0xff]
  %v155 = vld [vmem:[%s1 + $0x460] sm:$0xff]
  %v156 = vld [vmem:[%s1 + $0x468] sm:$0xff]
  %v157 = vld [vmem:[%s1 + $0x470] sm:$0xff]
  %v158 = vld [vmem:[%s1 + $0x478] sm:$0xff]
  %v159 = vld [vmem:[%s1 + $0x480] sm:$0xff]
  %v160 = vld [vmem:[%s1 + $0x488] sm:$0xff]
  %v161 = vld [vmem:[%s1 + $0x490] sm:$0xff]
  %v162 = vld [vmem:[%s1 + $0x498] sm:$0xff]
  %v163 = vld [vmem:[%s1 + $0x4a0] sm:$0xff]
  %v164 = vld [vmem:[%s1 + $0x4a8] sm:$0xff]
  %v165 = vld [vmem:[%s1 + $0x4b0] sm:$0xff]
  %v166 = vld [vmem:[%s1 + $0x4b8] sm:$0xff]
  %v167 = vld [vmem:[%s1 + $0x4c0] sm:$0xff]
  %v168 = vld [vmem:[%s1 + $0x4c8] sm:$0xff]
  %v169 = vld [vmem:[%s1 + $0x4d0] sm:$0xff]
  %v170 = vld [vmem:[%s1 + $0x4d8] sm:$0xff]
  %v171 = vld [vmem:[%s1 + $0x4e0] sm:$0xff]
  %v172 = vld [vmem:[%s1 + $0x4e8] sm:$0xff]
  %v173 = vld [vmem:[%s1 + $0x4f0] sm:$0xff]
  %v174 = vld [vmem:[%s1 + $0x4f8] sm:$0xff]
  %v175 = vld [vmem:[%s1 + $0x500] sm:$0xff]
  %v176 = vld [vmem:[%s1 + $0x508] sm:$0xff]
  %v177 = vld [vmem:[%s1 + $0x510] sm:$0xff]
  %v178 = vld [vmem:[%s1 + $0x518] sm:$0xff]
  %v179 = vld [vmem:[%s1 + $0x520] sm:$0xff]
  %v180 = vld [vmem:[%s1 + $0x528] sm:$0xff]
  %v181 = vld [vmem:[%s1 + $0x530] sm:$0xff]
  %v182 = vld [vmem:[%s1 + $0x538] sm:$0xff]
  %v183 = vld [vmem:[%s1 + $0x540] sm:$0xff]
  %v184 = vld [vmem:[%s1 + $0x548] sm:$0xff]
  %v185 = vld [vmem:[%s1 + $0x550] sm:$0xff]
  %v186 = vld [vmem:[%s1 + $0x558] sm:$0xff]
  %v187 = vld [vmem:[%s1 + $0x560] sm:$0xff]
  %v188 = vld [vmem:[%s1 + $0x568] sm:$0xff]
  %v189 = vld [vmem:[%s1 + $0x570] sm:$0xff]
  %v190 = vld [vmem:[%s1 + $0x578] sm:$0xff]
  %v191 = vld [vmem:[%s1 + $0x580] sm:$0xff]
  %v192 = vld [vmem:[%s1 + $0x588] sm:$0xff]
  %v193 = vld [vmem:[%s1 + $0x590] sm:$0xff]
  %v194 = vld [vmem:[%s1 + $0x598] sm:$0xff]
  %v195 = vld [vmem:[%s1 + $0x5a0] sm:$0xff]
  %v196 = vld [vmem:[%s1 + $0x5a8] sm:$0xff]
  %v197 = vld [vmem:[%s1 + $0x5b0] sm:$0xff]
  %v198 = vld [vmem:[%s1 + $0x5b8] sm:$0xff]
  %v199 = vld [vmem:[%s1 + $0x5c0] sm:$0xff]
  %v200 = vld [vmem:[%s1 + $0x5c8] sm:$0xff]
  %v201 = vld [vmem:[%s1 + $0x5d0] sm:$0xff]
  %v202 = vld [vmem:[%s1 + $0x5d8] sm:$0xff]
  %v203 = vld [vmem:[%s1 + $0x5e0] sm:$0xff]
  %v204 = vld [vmem:[%s1 + $0x5e8] sm:$0xff]
  %v205 = vld [vmem:[%s1 + $0x5f0] sm:$0xff]
  %v206 = vld [vmem:[%s1 + $0x5f8] sm:$0xff]
  %v207 = vld [vmem:[%s1 + $0x600] sm:$0xff]
  %v208 = vld [vmem:[%s1 + $0x608] sm:$0xff]
  %v209 = vld [vmem:[%s1 + $0x610] sm:$0xff]
  %v210 = vld [vmem:[%s1 + $0x618] sm:$0xff]
  %v211 = vld [vmem:[%s1 + $0x620] sm:$0xff]
  %v212 = vld [vmem:[%s1 + $0x628] sm:$0xff]
  %v213 = vld [vmem:[%s1 + $0x630] sm:$0xff]
  %v214 = vld [vmem:[%s1 + $0x638] sm:$0xff]
  %v215 = vld [vmem:[%s1 + $0x640] sm:$0xff]
  %v216 = vld [vmem:[%s1 + $0x648] sm:$0xff]
  %v217 = vld [vmem:[%s1 + $0x650] sm:$0xff]
  %v218 = vld [vmem:[%s1 + $0x658] sm:$0xff]
  %v219 = vld [vmem:[%s1 + $0x660] sm:$0xff]
  %v220 = vld [vmem:[%s1 + $0x668] sm:$0xff]
  %v221 = vld [vmem:[%s1 + $0x670] sm:$0xff]
  %v222 = vld [vmem:[%s1 + $0x678] sm:$0xff]
  %v223 = vld [vmem:[%s1 + $0x680] sm:$0xff]
  %v224 = vld [vmem:[%s1 + $0x688] sm:$0xff]
  %v225 = vld [vmem:[%s1 + $0x690] sm:$0xff]
  %v226 = vld [vmem:[%s1 + $0x698] sm:$0xff]
  %v227 = vld [vmem:[%s1 + $0x6a0] sm:$0xff]
  %v228 = vld [vmem:[%s1 + $0x6a8] sm:$0xff]
  %v229 = vld [vmem:[%s1 + $0x6b0] sm:$0xff]
  %v230 = vld [vmem:[%s1 + $0x6b8] sm:$0xff]
  %v231 = vld [vmem:[%s1 + $0x6c0] sm:$0xff]
  %v232 = vld [vmem:[%s1 + $0x6c8] sm:$0xff]
  %v233 = vld [vmem:[%s1 + $0x6d0] sm:$0xff]
  %v234 = vld [vmem:[%s1 + $0x6d8] sm:$0xff]
  %v235 = vld [vmem:[%s1 + $0x6e0] sm:$0xff]
  %v236 = vld [vmem:[%s1 + $0x6e8] sm:$0xff]
  %v237 = vld [vmem:[%s1 + $0x6f0] sm:$0xff]
  %v238 = vld [vmem:[%s1 + $0x6f8] sm:$0xff]
  %239 = vmatprep.subr.mxu0 %v16
  %240 = vmatpush1.msra.mxu0 %v15
  %241 = vmatprep.subr.mxu0 %v23
  %242 = vmatpush1.msra.mxu0 %v22
  %243 = vmatprep.subr.mxu0 %v30
  %244 = vmatpush1.msra.mxu0 %v29
  %245 = vmatprep.subr.mxu0 %v37
  %246 = vmatpush1.msra.mxu0 %v36
  %247 = vmatprep.subr.mxu0 %v44
  %248 = vmatpush1.msra.mxu0 %v43
  %249 = vmatprep.subr.mxu0 %v51
  %250 = vmatpush1.msra.mxu0 %v50
  %251 = vmatprep.subr.mxu0 %v58
  %252 = vmatpush1.msra.mxu0 %v57
  %253 = vmatprep.subr.mxu0 %v65
  %254 = vmatpush1.msra.mxu0 %v64
  %255 = vmatprep.subr.mxu0 %v72
  %256 = vmatpush1.msra.mxu0 %v71
  %257 = vmatprep.subr.mxu0 %v79
  %258 = vmatpush1.msra.mxu0 %v78
  %259 = vmatprep.subr.mxu0 %v86
  %260 = vmatpush1.msra.mxu0 %v85
  %261 = vmatprep.subr.mxu0 %v93
  %262 = vmatpush1.msra.mxu0 %v92
  %263 = vmatprep.subr.mxu0 %v100
  %264 = vmatpush1.msra.mxu0 %v99
  %265 = vmatprep.subr.mxu0 %v107
  %266 = vmatpush1.msra.mxu0 %v106
  %267 = vmatprep.subr.mxu0 %v114
  %268 = vmatpush1.msra.mxu0 %v113
  %269 = vmatprep.subr.mxu0 %v121
  %270 = vmatpush1.msra.mxu0 %v120
  %271 = vmatprep.subr.mxu0 %v128
  %272 = vmatpush1.msra.mxu0 %v127
  %273 = vmatprep.subr.mxu0 %v135
  %274 = vmatpush1.msra.mxu0 %v134
  %275 = vmatprep.subr.mxu0 %v142
  %276 = vmatpush1.msra.mxu0 %v141
  %277 = vmatprep.subr.mxu0 %v149
  %278 = vmatpush1.msra.mxu0 %v148
  %279 = vmatprep.subr.mxu0 %v156
  %280 = vmatpush1.msra.mxu0 %v155
  %281 = vmatprep.subr.mxu0 %v163
  %282 = vmatpush1.msra.mxu0 %v162
  %283 = vmatprep.subr.mxu0 %v170
  %284 = vmatpush1.msra.mxu0 %v169
  %285 = vmatprep.subr.mxu0 %v177
  %286 = vmatpush1.msra.mxu0 %v176
  %287 = vmatprep.subr.mxu0 %v184
  %288 = vmatpush1.msra.mxu0 %v183
  %289 = vmatprep.subr.mxu0 %v191
  %290 = vmatpush1.msra.mxu0 %v190
  %291 = vmatprep.subr.mxu0 %v198
  %292 = vmatpush1.msra.mxu0 %v197
  %293 = vmatprep.subr.mxu0 %v205
  %294 = vmatpush1.msra.mxu0 %v204
  %295 = vmatprep.subr.mxu0 %v212
  %296 = vmatpush1.msra.mxu0 %v211
  %297 = vmatprep.subr.mxu0 %v219
  %298 = vmatpush1.msra.mxu0 %v218
  %299 = vmatprep.subr.mxu0 %v226
  %300 = vmatpush1.msra.mxu0 %v225
  %301 = vmatprep.subr.mxu0 %v233
  %302 = vmatpush1.msra.mxu0 %v232
  %303 = vmatprep.mubr.f32.mxu0 %v12
  %304 = vmatmul.mubr.f32.gmra.mrb[0].mxu0 %v11
  %v305 = vpop.f32.mrb[0].mxu0
  %v306 = vadd.f32 0.0, %v305
  %v307 = vpop.f32.mrb[0].mxu0
  %v308 = vadd.f32 0.0, %v307
  %309 = vmatprep.mubr.f32.mxu0 %v14
  %310 = vmatmul.mubr.f32.gmra.mrb[0].mxu0 %v13
  %v311 = vpop.f32.mrb[0].mxu0
  %v312 = vadd.f32 0.0, %v311
  %v313 = vpop.f32.mrb[0].mxu0
  %v314 = vadd.f32 0.0, %v313
  %315 = vdwg.mxu0
  %316 = vmatprep.subr.mxu0 %v18
  %317 = vmatpush1.msra.mxu0 %v17
  %318 = vmatprep.subr.mxu0 %v25
  %319 = vmatpush1.msra.mxu0 %v24
  %320 = vmatprep.subr.mxu0 %v32
  %321 = vmatpush1.msra.mxu0 %v31
  %322 = vmatprep.subr.mxu0 %v39
  %323 = vmatpush1.msra.mxu0 %v38
  %324 = vmatprep.subr.mxu0 %v46
  %325 = vmatpush1.msra.mxu0 %v45
  %326 = vmatprep.subr.mxu0 %v53
  %327 = vmatpush1.msra.mxu0 %v52
  %328 = vmatprep.subr.mxu0 %v60
  %329 = vmatpush1.msra.mxu0 %v59
  %330 = vmatprep.subr.mxu0 %v67
  %331 = vmatpush1.msra.mxu0 %v66
  %332 = vmatprep.subr.mxu0 %v74
  %333 = vmatpush1.msra.mxu0 %v73
  %334 = vmatprep.subr.mxu0 %v81
  %335 = vmatpush1.msra.mxu0 %v80
  %336 = vmatprep.subr.mxu0 %v88
  %337 = vmatpush1.msra.mxu0 %v87
  %338 = vmatprep.subr.mxu0 %v95
  %339 = vmatpush1.msra.mxu0 %v94
  %340 = vmatprep.subr.mxu0 %v102
  %341 = vmatpush1.msra.mxu0 %v101
  %342 = vmatprep.subr.mxu0 %v109
  %343 = vmatpush1.msra.mxu0 %v108
  %344 = vmatprep.subr.mxu0 %v116
  %345 = vmatpush1.msra.mxu0 %v115
  %346 = vmatprep.subr.mxu0 %v123
  %347 = vmatpush1.msra.mxu0 %v122
  %348 = vmatprep.subr.mxu0 %v130
  %349 = vmatpush1.msra.mxu0 %v129
  %350 = vmatprep.subr.mxu0 %v137
  %351 = vmatpush1.msra.mxu0 %v136
  %352 = vmatprep.subr.mxu0 %v144
  %353 = vmatpush1.msra.mxu0 %v143
  %354 = vmatprep.subr.mxu0 %v151
  %355 = vmatpush1.msra.mxu0 %v150
  %356 = vmatprep.subr.mxu0 %v158
  %357 = vmatpush1.msra.mxu0 %v157
  %358 = vmatprep.subr.mxu0 %v165
  %359 = vmatpush1.msra.mxu0 %v164
  %360 = vmatprep.subr.mxu0 %v172
  %361 = vmatpush1.msra.mxu0 %v171
  %362 = vmatprep.subr.mxu0 %v179
  %363 = vmatpush1.msra.mxu0 %v178
  %364 = vmatprep.subr.mxu0 %v186
  %365 = vmatpush1.msra.mxu0 %v185
  %366 = vmatprep.subr.mxu0 %v193
  %367 = vmatpush1.msra.mxu0 %v192
  %368 = vmatprep.subr.mxu0 %v200
  %369 = vmatpush1.msra.mxu0 %v199
  %370 = vmatprep.subr.mxu0 %v207
  %371 = vmatpush1.msra.mxu0 %v206
  %372 = vmatprep.subr.mxu0 %v214
  %373 = vmatpush1.msra.mxu0 %v213
  %374 = vmatprep.subr.mxu0 %v221
  %375 = vmatpush1.msra.mxu0 %v220
  %376 = vmatprep.subr.mxu0 %v228
  %377 = vmatpush1.msra.mxu0 %v227
  %378 = vmatprep.subr.mxu0 %v235
  %379 = vmatpush1.msra.mxu0 %v234
  %380 = vmatprep.mubr.f32.mxu0 %v12
  %381 = vmatmul.mubr.f32.gmra.mrb[0].mxu0 %v11
  %v382 = vpop.f32.mrb[0].mxu0
  %v383 = vadd.f32 0.0, %v382
  %v384 = vpop.f32.mrb[0].mxu0
  %v385 = vadd.f32 0.0, %v384
  %386 = vmatprep.mubr.f32.mxu0 %v14
  %387 = vmatmul.mubr.f32.gmra.mrb[0].mxu0 %v13
  %v388 = vpop.f32.mrb[0].mxu0
  %v389 = vadd.f32 0.0, %v388
  %v390 = vpop.f32.mrb[0].mxu0
  %v391 = vadd.f32 0.0, %v390
  %392 = vdwg.mxu0
  %393 = vmatprep.subr.mxu0 %v20
  %394 = vmatpush1.msra.mxu0 %v19
  %395 = vmatprep.subr.mxu0 %v27
  %396 = vmatpush1.msra.mxu0 %v26
  %397 = vmatprep.subr.mxu0 %v34
  %398 = vmatpush1.msra.mxu0 %v33
  %399 = vmatprep.subr.mxu0 %v41
  %400 = vmatpush1.msra.mxu0 %v40
  %401 = vmatprep.subr.mxu0 %v48
  %402 = vmatpush1.msra.mxu0 %v47
  %403 = vmatprep.subr.mxu0 %v55
  %404 = vmatpush1.msra.mxu0 %v54
  %405 = vmatprep.subr.mxu0 %v62
  %406 = vmatpush1.msra.mxu0 %v61
  %407 = vmatprep.subr.mxu0 %v69
  %408 = vmatpush1.msra.mxu0 %v68
  %409 = vmatprep.subr.mxu0 %v76
  %410 = vmatpush1.msra.mxu0 %v75
  %411 = vmatprep.subr.mxu0 %v83
  %412 = vmatpush1.msra.mxu0 %v82
  %413 = vmatprep.subr.mxu0 %v90
  %414 = vmatpush1.msra.mxu0 %v89
  %415 = vmatprep.subr.mxu0 %v97
  %416 = vmatpush1.msra.mxu0 %v96
  %417 = vmatprep.subr.mxu0 %v104
  %418 = vmatpush1.msra.mxu0 %v103
  %419 = vmatprep.subr.mxu0 %v111
  %420 = vmatpush1.msra.mxu0 %v110
  %421 = vmatprep.subr.mxu0 %v118
  %422 = vmatpush1.msra.mxu0 %v117
  %423 = vmatprep.subr.mxu0 %v125
  %424 = vmatpush1.msra.mxu0 %v124
  %425 = vmatprep.subr.mxu0 %v132
  %426 = vmatpush1.msra.mxu0 %v131
  %427 = vmatprep.subr.mxu0 %v139
  %428 = vmatpush1.msra.mxu0 %v138
  %429 = vmatprep.subr.mxu0 %v146
  %430 = vmatpush1.msra.mxu0 %v145
  %431 = vmatprep.subr.mxu0 %v153
  %432 = vmatpush1.msra.mxu0 %v152
  %433 = vmatprep.subr.mxu0 %v160
  %434 = vmatpush1.msra.mxu0 %v159
  %435 = vmatprep.subr.mxu0 %v167
  %436 = vmatpush1.msra.mxu0 %v166
  %437 = vmatprep.subr.mxu0 %v174
  %438 = vmatpush1.msra.mxu0 %v173
  %439 = vmatprep.subr.mxu0 %v181
  %440 = vmatpush1.msra.mxu0 %v180
  %441 = vmatprep.subr.mxu0 %v188
  %442 = vmatpush1.msra.mxu0 %v187
  %443 = vmatprep.subr.mxu0 %v195
  %444 = vmatpush1.msra.mxu0 %v194
  %445 = vmatprep.subr.mxu0 %v202
  %446 = vmatpush1.msra.mxu0 %v201
  %447 = vmatprep.subr.mxu0 %v209
  %448 = vmatpush1.msra.mxu0 %v208
  %449 = vmatprep.subr.mxu0 %v216
  %450 = vmatpush1.msra.mxu0 %v215
  %451 = vmatprep.subr.mxu0 %v223
  %452 = vmatpush1.msra.mxu0 %v222
  %453 = vmatprep.subr.mxu0 %v230
  %454 = vmatpush1.msra.mxu0 %v229
  %455 = vmatprep.subr.mxu0 %v237
  %456 = vmatpush1.msra.mxu0 %v236
  %457 = vmatprep.mubr.f32.mxu0 %v12
  %458 = vmatmul.mubr.f32.gmra.mrb[0].mxu0 %v11
  %v459 = vpop.f32.mrb[0].mxu0
  %v460 = vadd.f32 0.0, %v459
  %v461 = vpop.f32.mrb[0].mxu0
  %v462 = vadd.f32 0.0, %v461
  %463 = vmatprep.mubr.f32.mxu0 %v14
  %464 = vmatmul.mubr.f32.gmra.mrb[0].mxu0 %v13
  %v465 = vpop.f32.mrb[0].mxu0
  %v466 = vadd.f32 0.0, %v465
  %v467 = vpop.f32.mrb[0].mxu0
  %v468 = vadd.f32 0.0, %v467
  %469 = vdwg.mxu0
  %470 = vmatprep.subr.mxu0 0.0
  %471 = vmatpush1.msra.mxu0 %v21
  %472 = vmatprep.subr.mxu0 0.0
  %473 = vmatpush1.msra.mxu0 %v28
  %474 = vmatprep.subr.mxu0 0.0
  %475 = vmatpush1.msra.mxu0 %v35
  %476 = vmatprep.subr.mxu0 0.0
  %477 = vmatpush1.msra.mxu0 %v42
  %478 = vmatprep.subr.mxu0 0.0
  %479 = vmatpush1.msra.mxu0 %v49
  %480 = vmatprep.subr.mxu0 0.0
  %481 = vmatpush1.msra.mxu0 %v56
  %482 = vmatprep.subr.mxu0 0.0
  %483 = vmatpush1.msra.mxu0 %v63
  %484 = vmatprep.subr.mxu0 0.0
  %485 = vmatpush1.msra.mxu0 %v70
  %486 = vmatprep.subr.mxu0 0.0
  %487 = vmatpush1.msra.mxu0 %v77
  %488 = vmatprep.subr.mxu0 0.0
  %489 = vmatpush1.msra.mxu0 %v84
  %490 = vmatprep.subr.mxu0 0.0
  %491 = vmatpush1.msra.mxu0 %v91
  %492 = vmatprep.subr.mxu0 0.0
  %493 = vmatpush1.msra.mxu0 %v98
  %494 = vmatprep.subr.mxu0 0.0
  %495 = vmatpush1.msra.mxu0 %v105
  %496 = vmatprep.subr.mxu0 0.0
  %497 = vmatpush1.msra.mxu0 %v112
  %498 = vmatprep.subr.mxu0 0.0
  %499 = vmatpush1.msra.mxu0 %v119
  %500 = vmatprep.subr.mxu0 0.0
  %501 = vmatpush1.msra.mxu0 %v126
  %502 = vmatprep.subr.mxu0 0.0
  %503 = vmatpush1.msra.mxu0 %v133
  %504 = vmatprep.subr.mxu0 0.0
  %505 = vmatpush1.msra.mxu0 %v140
  %506 = vmatprep.subr.mxu0 0.0
  %507 = vmatpush1.msra.mxu0 %v147
  %508 = vmatprep.subr.mxu0 0.0
  %509 = vmatpush1.msra.mxu0 %v154
  %510 = vmatprep.subr.mxu0 0.0
  %511 = vmatpush1.msra.mxu0 %v161
  %512 = vmatprep.subr.mxu0 0.0
  %513 = vmatpush1.msra.mxu0 %v168
  %514 = vmatprep.subr.mxu0 0.0
  %515 = vmatpush1.msra.mxu0 %v175
  %516 = vmatprep.subr.mxu0 0.0
  %517 = vmatpush1.msra.mxu0 %v182
  %518 = vmatprep.subr.mxu0 0.0
  %519 = vmatpush1.msra.mxu0 %v189
  %520 = vmatprep.subr.mxu0 0.0
  %521 = vmatpush1.msra.mxu0 %v196
  %522 = vmatprep.subr.mxu0 0.0
  %523 = vmatpush1.msra.mxu0 %v203
  %524 = vmatprep.subr.mxu0 0.0
  %525 = vmatpush1.msra.mxu0 %v210
  %526 = vmatprep.subr.mxu0 0.0
  %527 = vmatpush1.msra.mxu0 %v217
  %528 = vmatprep.subr.mxu0 0.0
  %529 = vmatpush1.msra.mxu0 %v224
  %530 = vmatprep.subr.mxu0 0.0
  %531 = vmatpush1.msra.mxu0 %v231
  %532 = vmatprep.subr.mxu0 0.0
  %533 = vmatpush1.msra.mxu0 %v238
  %534 = vmatprep.mubr.f32.mxu0 %v12
  %535 = vmatmul.mubr.f32.gmra.mrb[0].mxu0 %v11
  %v536 = vpop.f32.mrb[0].mxu0
  %v537 = vadd.f32 0.0, %v536
  %v538 = vpop.f32.mrb[0].mxu0
  %539 = vmatprep.mubr.f32.mxu0 %v14
  %540 = vmatmul.mubr.f32.gmra.mrb[0].mxu0 %v13
  %v541 = vpop.f32.mrb[0].mxu0
  %v542 = vadd.f32 0.0, %v541
  %v543 = vpop.f32.mrb[0].mxu0
  %544 = vdwg.mxu0
  %vm545 = vcmp.gt.f32.partialorder %v306, 0.0
  %vm546 = vcmp.gt.f32.partialorder %v308, 0.0
  %vm547 = vcmp.gt.f32.partialorder %v383, 0.0
  %vm548 = vcmp.gt.f32.partialorder %v385, 0.0
  %vm549 = vcmp.gt.f32.partialorder %v460, 0.0
  %vm550 = vcmp.gt.f32.partialorder %v462, 0.0
  %vm551 = vcmp.gt.f32.partialorder %v537, 0.0
  %vm552 = vcmp.gt.f32.partialorder %v312, 0.0
  %vm553 = vcmp.gt.f32.partialorder %v314, 0.0
  %vm554 = vcmp.gt.f32.partialorder %v389, 0.0
  %vm555 = vcmp.gt.f32.partialorder %v391, 0.0
  %vm556 = vcmp.gt.f32.partialorder %v466, 0.0
  %vm557 = vcmp.gt.f32.partialorder %v468, 0.0
  %vm558 = vcmp.gt.f32.partialorder %v542, 0.0
  %v559 = vmul.f32 %v306, 5.77
  %v560 = vmul.f32 %v308, 5.77
  %v561 = vmul.f32 %v383, 5.77
  %v562 = vmul.f32 %v385, 5.77
  %v563 = vmul.f32 %v460, 5.77
  %v564 = vmul.f32 %v462, 5.77
  %v565 = vmul.f32 %v537, 5.77
  %v566 = vmul.f32 %v312, 5.77
  %v567 = vmul.f32 %v314, 5.77
  %v568 = vmul.f32 %v389, 5.77
  %v569 = vmul.f32 %v391, 5.77
  %v570 = vmul.f32 %v466, 5.77
  %v571 = vmul.f32 %v468, 5.77
  %v572 = vmul.f32 %v542, 5.77
  %v573 = vsel %vm545, %v306, %v559
  %v574 = vsel %vm546, %v308, %v560
  %v575 = vsel %vm547, %v383, %v561
  %v576 = vsel %vm548, %v385, %v562
  %v577 = vsel %vm549, %v460, %v563
  %v578 = vsel %vm550, %v462, %v564
  %v579 = vsel %vm551, %v537, %v565
  %v580 = vsel %vm552, %v312, %v566
  %v581 = vsel %vm553, %v314, %v567
  %v582 = vsel %vm554, %v389, %v568
  %v583 = vsel %vm555, %v391, %v569
  %v584 = vsel %vm556, %v466, %v570
  %v585 = vsel %vm557, %v468, %v571
  %v586 = vsel %vm558, %v542, %v572
  %587 = vst [vmem:[%s2] sm:$0xff] %v573
  %588 = vst [vmem:[%s2 + $0x8] sm:$0xff] %v574
  %589 = vst [vmem:[%s2 + $0x10] sm:$0xff] %v575
  %590 = vst [vmem:[%s2 + $0x18] sm:$0xff] %v576
  %591 = vst [vmem:[%s2 + $0x20] sm:$0xff] %v577
  %592 = vst [vmem:[%s2 + $0x28] sm:$0xff] %v578
  %593 = vst [vmem:[%s2 + $0x30] sm:$0xff] %v579
  %594 = vst [vmem:[%s2 + $0x38] sm:$0xff] %v580
  %595 = vst [vmem:[%s2 + $0x40] sm:$0xff] %v581
  %596 = vst [vmem:[%s2 + $0x48] sm:$0xff] %v582
  %597 = vst [vmem:[%s2 + $0x50] sm:$0xff] %v583
  %598 = vst [vmem:[%s2 + $0x58] sm:$0xff] %v584
  %599 = vst [vmem:[%s2 + $0x60] sm:$0xff] %v585
  %600 = vst [vmem:[%s2 + $0x68] sm:$0xff] %v586
  // Predicated region
  $region10: #{_lambda_.1} parent=0 // pred_check
    _
  $region11: #{_lambda_.1} parent=0 // pred_check_branch
    %602 = sbr.rel (0) target = $region13
  $region12: #{_lambda_.1} parent=0 // pred_region
    _
  $region13: #{_lambda_.1} parent=0 // pred_fallthru
    _
  // Predicated region
  $region14: #{_lambda_.1} parent=0 // pred_check
    _
  $region15: #{_lambda_.1} parent=0 // pred_check_branch
    %604 = sbr.rel (0) target = $region17
  $region16: #{_lambda_.1} parent=0 // pred_region
    _
  $region17: #{_lambda_.1} parent=0 // pred_fallthru
    _

</llo_original>
